<compile_context>
chip_gen: v7x
topology: tpu7x:2x2x1
jax: 0.10.0
libtpu: 0.0.40
codegen_flags: <defaults>
</compile_context>

<pallas_src>
import jax
import jax.numpy as jnp
from jax import lax
from jax.experimental import pallas as pl
from jax.experimental.pallas import tpu as pltpu

EPS = 1e-5  # torch.nn.InstanceNorm2d default eps
_VMEM_LIMIT_BYTES = 32 * 1024 * 1024  # explicit scoped-VMEM budget (safe on all gens)


def _gelu_tanh(x):
    # TODO(synk): torch nn.GELU() defaults to the exact erf formulation; Mosaic has
    # no erf lowering, so the tanh approximation is used (max abs err ~1e-3).
    c = 0.7978845608028654  # sqrt(2/pi)
    return 0.5 * x * (1.0 + jnp.tanh(c * (x + 0.044715 * x * x * x)))


def _inorm_onepass(x, gamma, beta):
    """One-pass InstanceNorm over the last (spatial) axis; x: (C, P) f32."""
    mean = jnp.mean(x, axis=1, keepdims=True)
    msq = jnp.mean(x * x, axis=1, keepdims=True)
    var = jnp.maximum(msq - mean * mean, 0.0)
    return (x - mean) * lax.rsqrt(var + EPS) * gamma + beta


# ------------------------------ Pallas kernels ------------------------------ #
# Fused pointwise MLP: conv1x1 -> InstanceNorm2d(affine) -> GELU -> conv1x1,
# lane-dense (C, P) layout per sample.  Optional fused trailing InstanceNorm
# (the leading norm of CoDA block 0) as a second output.

def _fused_mlp_kernel(x_ref, w1_ref, b1_ref, g_ref, bt_ref, w2_ref, b2_ref, o_ref):
    w1 = w1_ref[...].astype(jnp.bfloat16)                              # (Ch, Cin)
    w2 = w2_ref[...].astype(jnp.bfloat16)                              # (Cout, Ch)
    x = x_ref[0].astype(jnp.bfloat16)                                  # (Cin, P)
    h = jnp.dot(w1, x, preferred_element_type=jnp.float32) + b1_ref[...]
    h = _inorm_onepass(h, g_ref[...], bt_ref[...])
    h = _gelu_tanh(h)
    o_ref[0] = jnp.dot(w2, h.astype(jnp.bfloat16),
                       preferred_element_type=jnp.float32) + b2_ref[...]


def _fused_mlp_norm_kernel(x_ref, w1_ref, b1_ref, g_ref, bt_ref, w2_ref, b2_ref,
                           gn_ref, bn_ref, o_ref, on_ref):
    w1 = w1_ref[...].astype(jnp.bfloat16)
    w2 = w2_ref[...].astype(jnp.bfloat16)
    x = x_ref[0].astype(jnp.bfloat16)
    h = jnp.dot(w1, x, preferred_element_type=jnp.float32) + b1_ref[...]
    h = _inorm_onepass(h, g_ref[...], bt_ref[...])
    h = _gelu_tanh(h)
    o = jnp.dot(w2, h.astype(jnp.bfloat16),
                preferred_element_type=jnp.float32) + b2_ref[...]      # (Cout, P)
    o_ref[0] = o
    # Fused leading InstanceNorm of CoDA block 0 (per-sample token-group affine).
    on_ref[0] = _inorm_onepass(o, gn_ref[0], bn_ref[0])


def fused_pointwise_mlp(x, w1, b1, g, bt, w2, b2,
                        norm_gamma=None, norm_beta=None, groups=1):
    """x: (N, Cin, P) channels-on-sublanes, spatial-on-lanes.

    Returns (N, Cout, P), or a pair (raw, normalized) if norm_gamma/beta
    (shape (groups*Cout, 1), token-major) are given.
    """
    n, cin, p = x.shape
    ch = w1.shape[1]
    cout = w2.shape[1]
    w1t = jnp.transpose(w1)                          # (Ch, Cin)  (tiny, done once)
    w2t = jnp.transpose(w2)                          # (Cout, Ch)
    b1c = jnp.reshape(b1, (ch, 1))
    gc = jnp.reshape(g, (ch, 1))
    btc = jnp.reshape(bt, (ch, 1))
    b2c = jnp.reshape(b2, (cout, 1))
    base_specs = [
        pl.BlockSpec((1, cin, p), lambda i: (i, 0, 0)),
        pl.BlockSpec((ch, cin), lambda i: (0, 0)),
        pl.BlockSpec((ch, 1), lambda i: (0, 0)),
        pl.BlockSpec((ch, 1), lambda i: (0, 0)),
        pl.BlockSpec((ch, 1), lambda i: (0, 0)),
        pl.BlockSpec((cout, ch), lambda i: (0, 0)),
        pl.BlockSpec((cout, 1), lambda i: (0, 0)),
    ]
    cparams = pltpu.CompilerParams(dimension_semantics=("parallel",),
                                   vmem_limit_bytes=_VMEM_LIMIT_BYTES)
    if norm_gamma is None:
        return pl.pallas_call(
            _fused_mlp_kernel,
            out_shape=jax.ShapeDtypeStruct((n, cout, p), jnp.float32),
            grid=(n,),
            in_specs=base_specs,
            out_specs=pl.BlockSpec((1, cout, p), lambda i: (i, 0, 0)),
            compiler_params=cparams,
        )(x, w1t, b1c, gc, btc, w2t, b2c)

    # Per-sample affine for the fused block-0 norm: sample n -> token group n % groups.
    reps = n // groups
    gn = jnp.tile(jnp.reshape(norm_gamma, (groups, cout, 1)), (reps, 1, 1))
    bn = jnp.tile(jnp.reshape(norm_beta, (groups, cout, 1)), (reps, 1, 1))
    out, out_n = pl.pallas_call(
        _fused_mlp_norm_kernel,
        out_shape=(jax.ShapeDtypeStruct((n, cout, p), jnp.float32),
                   jax.ShapeDtypeStruct((n, cout, p), jnp.float32)),
        grid=(n,),
        in_specs=base_specs + [pl.BlockSpec((1, cout, 1), lambda i: (i, 0, 0)),
                               pl.BlockSpec((1, cout, 1), lambda i: (i, 0, 0))],
        out_specs=(pl.BlockSpec((1, cout, p), lambda i: (i, 0, 0)),
                   pl.BlockSpec((1, cout, p), lambda i: (i, 0, 0))),
        compiler_params=cparams,
    )(x, w1t, b1c, gc, btc, w2t, b2c, gn, bn)
    return out, out_n


# Codomain (token) attention with fused residual add and fused post-attention
# InstanceNorm (second output).  q/k/v arrive as bf16; accumulation in f32.

def _attn_norm_kernel(xres_ref, q_ref, k_ref, v_ref, g_ref, b_ref, o_ref, xm_ref):
    q = q_ref[0]                                                        # (T, D) bf16
    k = k_ref[0]
    v = v_ref[0]
    # TODO(synk): scale uses D = H*W (spatial token length) — CoDABlock2D source
    # was not provided; this follows the per-channel-token CoDA-NO formulation.
    scale = float(q_ref.shape[-1]) ** -0.5
    # contract last dims directly: no explicit transpose of k
    s = lax.dot_general(q, k, (((1,), (1,)), ((), ())),
                        preferred_element_type=jnp.float32) * scale     # (T, T)
    s = s - jnp.max(s, axis=-1, keepdims=True)
    e = jnp.exp(s)
    a = e * pl.reciprocal(jnp.sum(e, axis=-1, keepdims=True), approx=True)
    pv = lax.dot_general(a.astype(jnp.bfloat16), v, (((1,), (0,)), ((), ())),
                         preferred_element_type=jnp.float32)            # (T, D)
    o = xres_ref[0] + pv                                                # fused residual
    o_ref[0] = o
    xm_ref[0] = _inorm_onepass(o, g_ref[...], b_ref[...])               # fused norm


def token_attention(xres, q, k, v, g2, b2):
    """Returns (xres + softmax(q k^T / sqrt(D)) v,  InstanceNorm(out, g2, b2))."""
    b, t, d = q.shape
    spec = pl.BlockSpec((1, t, d), lambda i: (i, 0, 0))
    cspec = pl.BlockSpec((t, 1), lambda i: (0, 0))
    return pl.pallas_call(
        _attn_norm_kernel,
        out_shape=(jax.ShapeDtypeStruct((b, t, d), jnp.float32),
                   jax.ShapeDtypeStruct((b, t, d), jnp.float32)),
        grid=(b,),
        in_specs=[spec, spec, spec, spec, cspec, cspec],
        out_specs=(spec, spec),
        compiler_params=pltpu.CompilerParams(dimension_semantics=("parallel",),
                                             vmem_limit_bytes=_VMEM_LIMIT_BYTES),
    )(xres, q, k, v, g2, b2)


# Mix finalize: out = xf + GELU(mix + xm*w_pw + b_pw), optionally also emitting
# the leading InstanceNorm of the NEXT block (second output).

def _mix_finalize_kernel(w_ref, b_ref, xf_ref, xm_ref, mix_ref, o_ref):
    w = w_ref[0]                                     # SMEM scalars
    bb = b_ref[0]
    o_ref[0] = xf_ref[0] + _gelu_tanh(mix_ref[0].astype(jnp.float32)
                                      + xm_ref[0] * w + bb)


def _mix_finalize_norm_kernel(w_ref, b_ref, xf_ref, xm_ref, mix_ref,
                              gn_ref, bn_ref, o_ref, on_ref):
    w = w_ref[0]
    bb = b_ref[0]
    o = xf_ref[0] + _gelu_tanh(mix_ref[0].astype(jnp.float32) + xm_ref[0] * w + bb)
    o_ref[0] = o
    on_ref[0] = _inorm_onepass(o, gn_ref[...], bn_ref[...])


def mix_finalize(w_pw, b_pw, xf, xm, mix, next_gamma=None, next_beta=None):
    """Fused: xf + GELU(mix + xm*w_pw + b_pw) [+ next block's leading norm]."""
    b, t, p = xf.shape
    spec = pl.BlockSpec((1, t, p), lambda i: (i, 0, 0))
    smem = pl.BlockSpec(memory_space=pltpu.MemorySpace.SMEM)
    cspec = pl.BlockSpec((t, 1), lambda i: (0, 0))
    cparams = pltpu.CompilerParams(dimension_semantics=("parallel",),
                                   vmem_limit_bytes=_VMEM_LIMIT_BYTES)
    w1 = jnp.reshape(w_pw, (1,))
    bb1 = jnp.reshape(b_pw, (1,))
    if next_gamma is None:
        out = pl.pallas_call(
            _mix_finalize_kernel,
            out_shape=jax.ShapeDtypeStruct((b, t, p), jnp.float32),
            grid=(b,),
            in_specs=[smem, smem, spec, spec, spec],
            out_specs=spec,
            compiler_params=cparams,
        )(w1, bb1, xf, xm, mix)
        return out, None
    out, out_n = pl.pallas_call(
        _mix_finalize_norm_kernel,
        out_shape=(jax.ShapeDtypeStruct((b, t, p), jnp.float32),
                   jax.ShapeDtypeStruct((b, t, p), jnp.float32)),
        grid=(b,),
        in_specs=[smem, smem, spec, spec, spec, cspec, cspec],
        out_specs=(spec, spec),
        compiler_params=cparams,
    )(w1, bb1, xf, xm, mix, next_gamma, next_beta)
    return out, out_n


# ------------------------------ JAX glue (FFT) ------------------------------ #

def irfft2_from_modes(coef, h, w):
    """torch.fft.irfftn(coef, s=(h, w)) semantics: trim/zero-pad modes then inverse rFFT."""
    mh, mw = coef.shape[-2], coef.shape[-1]
    wh = w // 2 + 1
    buf = jnp.zeros(coef.shape[:-2] + (h, wh), dtype=coef.dtype)
    buf = buf.at[..., : min(mh, h), : min(mw, wh)].set(
        coef[..., : min(mh, h), : min(mw, wh)])
    return jnp.fft.irfft2(buf, s=(h, w), axes=(-2, -1))


def _apply_spectral_weights(xhat, w_low, w_high, m1, m2):
    out = jnp.zeros_like(xhat)
    out = out.at[..., :m1, :m2].set(xhat[..., :m1, :m2] * w_low)
    out = out.at[..., -m1:, :m2].set(xhat[..., -m1:, :m2] * w_high)
    return out


def spectral_conv_1ch(x, w_low, w_high, modes):
    """Per-token 1->1 channel FNO spectral convolution (weights shared across tokens).

    NOTE: assumes 2*m1 <= H; positive/negative mode writes would overlap otherwise.
    """
    m1, m2 = modes
    h, w = x.shape[-2], x.shape[-1]
    xhat = jnp.fft.rfft2(x, axes=(-2, -1))
    return jnp.fft.irfft2(_apply_spectral_weights(xhat, w_low, w_high, m1, m2),
                          s=(h, w), axes=(-2, -1))


# ------------------------------- CoDA block --------------------------------- #

def coda_block(xf, xn, p, modes, h, w, next_norm):
    # TODO(synk): CoDABlock2D source was not provided with the module; this block
    # follows the CoDA-NO paper (arXiv:2403.12553): per-token spectral K/Q/V
    # projections, codomain (token) attention, and an FNO-style mixer, with
    # token_dim = attention_dim = 1, n_heads = 1, spatial_scaling = 1.
    #
    # xf: (B, T, P) residual stream; xn: (B, T, P) = InstanceNorm(xf, g1, b1)
    # (already produced, fused, by the upstream kernel).
    b, t, pdim = xf.shape
    m1, m2 = modes
    xn_hat = jnp.fft.rfft2(xn.reshape(b, t, h, w), axes=(-2, -1))   # rFFT once, reuse 3x

    def proj(w_lo, w_hi):
        y = jnp.fft.irfft2(_apply_spectral_weights(xn_hat, w_lo, w_hi, m1, m2),
                           s=(h, w), axes=(-2, -1))
        return y.reshape(b, t, pdim).astype(jnp.bfloat16)           # bf16 I/O to Pallas

    q = proj(p["wq_lo"], p["wq_hi"])
    k = proj(p["wk_lo"], p["wk_hi"])
    v = proj(p["wv_lo"], p["wv_hi"])

    xf, xm = token_attention(xf, q, k, v, p["g2"], p["b2"])         # residual+norm fused

    mix = spectral_conv_1ch(xm.reshape(b, t, h, w), p["wm_lo"], p["wm_hi"], modes)
    mix = mix.reshape(b, t, pdim).astype(jnp.bfloat16)              # bf16 I/O to Pallas

    if next_norm is None:
        xf, xn_next = mix_finalize(p["w_pw"], p["b_pw"], xf, xm, mix)
    else:
        xf, xn_next = mix_finalize(p["w_pw"], p["b_pw"], xf, xm, mix,
                                   next_norm[0], next_norm[1])      # next block's norm fused
    return xf, xn_next


# ------------------------------ CoDANO forward ------------------------------ #

def codano_forward(x, params, cfg):
    b, v, h, w = x.shape
    hc = cfg["hidden_variable_codimension"]

    # --- _extend_variables: fixed grid encoding + Fourier positional encoding ---
    x_lin = jnp.linspace(-1.0, 1.0, w)
    y_lin = jnp.linspace(-1.0, 1.0, h)
    grid_y, grid_x = jnp.meshgrid(y_lin, x_lin, indexing="ij")
    grid = jnp.stack([grid_x, grid_y], axis=0)                          # (2, H, W)
    grid = jnp.broadcast_to(grid[None, None], (b, v, 2, h, w))
    xe = jnp.concatenate([x[:, :, None], grid], axis=2)                 # (B, V, 3, H, W)

    pos = jnp.stack(
        [irfft2_from_modes(params["pos_enc"][vid], h, w) for vid in cfg["variable_ids"]],
        axis=1)                                                         # (1, V, pd, H, W)
    pos = jnp.broadcast_to(pos, (b, v, pos.shape[2], h, w))
    xe = jnp.concatenate([xe, pos], axis=2)                             # (B, V, Cext, H, W)
    cext = xe.shape[2]
    n = b * v
    pdim = h * w
    t_tok = v * hc

    # --- lifting: conv1x1 -> InstanceNorm -> GELU -> conv1x1 (fused Pallas) ---
    # lane-dense (N, C, P) layout: no transposes needed on either side.
    xl = xe.reshape(n, cext, pdim)
    lp = params["lifting"]
    blocks = params["blocks"]
    if blocks:
        hid, hid_n = fused_pointwise_mlp(
            xl, lp["w1"], lp["b1"], lp["g"], lp["bt"], lp["w2"], lp["b2"],
            norm_gamma=blocks[0]["g1"], norm_beta=blocks[0]["b1"], groups=v)
        xf = hid.reshape(b, t_tok, pdim)
        xn = hid_n.reshape(b, t_tok, pdim)
    else:
        hid = fused_pointwise_mlp(xl, lp["w1"], lp["b1"], lp["g"], lp["bt"],
                                  lp["w2"], lp["b2"])
        xf = hid.reshape(b, t_tok, pdim)
        xn = None

    # --- CoDA blocks ---
    for li, bp in enumerate(blocks):
        nxt = ((blocks[li + 1]["g1"], blocks[li + 1]["b1"])
               if li + 1 < len(blocks) else None)
        xf, xn = coda_block(xf, xn, bp, cfg["modes"], h, w, nxt)

    # --- projection: conv1x1 -> InstanceNorm -> GELU -> conv1x1 (fused Pallas) ---
    xp = xf.reshape(n, hc, pdim)
    pp = params["project"]
    out = fused_pointwise_mlp(xp, pp["w1"], pp["b1"], pp["g"], pp["bt"],
                              pp["w2"], pp["b2"])
    return out.reshape(b, v, h, w)


# ------------------------------- parameters --------------------------------- #

def init_params(key, cfg):
    vids = cfg["variable_ids"]
    pd = cfg["positional_encoding_dim"]
    pm1, pm2 = cfg["positional_encoding_modes"]
    hl = cfg["hidden_lifting_channels"]
    hc = cfg["hidden_variable_codimension"]
    m1, m2 = cfg["modes"]
    cext = 1 + cfg["static_channel_dim"] + pd + 2  # fixed_pos_encoding=True

    keys = iter(jax.random.split(key, 256))

    def conv1x1(cin, cout):
        bound = float(1.0 / (cin ** 0.5))
        w = jax.random.uniform(next(keys), (cin, cout), jnp.float32, -bound, bound)
        bb = jax.random.uniform(next(keys), (1, cout), jnp.float32, -bound, bound)
        return w, bb

    def spec_w(scale=0.1):
        re = jax.random.normal(next(keys), (m1, m2))
        im = jax.random.normal(next(keys), (m1, m2))
        return (scale * (re + 1j * im)).astype(jnp.complex64)

    pos_enc = {}
    for vid in vids:
        re = jax.random.normal(next(keys), (1, pd, pm1, pm2))
        im = jax.random.normal(next(keys), (1, pd, pm1, pm2))
        pos_enc[vid] = (re + 1j * im).astype(jnp.complex64)

    def mlp(cin, chid, cout):
        w1, b1 = conv1x1(cin, chid)
        w2, b2 = conv1x1(chid, cout)
        return dict(w1=w1, b1=b1,
                    g=jnp.ones((1, chid), jnp.float32),   # InstanceNorm affine init
                    bt=jnp.zeros((1, chid), jnp.float32),
                    w2=w2, b2=b2)

    t = len(vids) * hc
    blocks = []
    for _ in range(cfg["n_layers"]):
        blocks.append(dict(
            g1=jnp.ones((t, 1), jnp.float32), b1=jnp.zeros((t, 1), jnp.float32),
            g2=jnp.ones((t, 1), jnp.float32), b2=jnp.zeros((t, 1), jnp.float32),
            wq_lo=spec_w(), wq_hi=spec_w(),
            wk_lo=spec_w(), wk_hi=spec_w(),
            wv_lo=spec_w(), wv_hi=spec_w(),
            wm_lo=spec_w(), wm_hi=spec_w(),
            w_pw=0.1 * jax.random.normal(next(keys), (), jnp.float32),
            b_pw=jnp.zeros((), jnp.float32),
        ))

    return dict(pos_enc=pos_enc,
                lifting=mlp(cext, hl, hc),
                project=mlp(hc, hl, 1),
                blocks=blocks)


# ---------------------------------- main ------------------------------------ #

if __name__ == "__main__":
    cfg = dict(
        variable_ids=("u", "v"),
        hidden_lifting_channels=16,
        hidden_variable_codimension=8,
        positional_encoding_dim=4,
        positional_encoding_modes=(16, 16),
        static_channel_dim=0,
        modes=(4, 4),
        n_layers=2,
    )
    key = jax.random.PRNGKey(0)
    pkey, xkey = jax.random.split(key)
    params = init_params(pkey, cfg)

    B, V, H, W = 2, len(cfg["variable_ids"]), 16, 16
    x = jax.random.normal(xkey, (B, V, H, W), jnp.float32)

    out = codano_forward(x, params, cfg)
    out = jax.block_until_ready(out)

    assert out.shape == (B, V, H, W), out.shape
    assert bool(jnp.all(jnp.isfinite(out)))
    print("KERNEL_OK")
</pallas_src>

<mosaic_0001>
module attributes {stable_mosaic.version = 11 : i64} {
  func.func @_fused_mlp_norm_kernel(%arg0: i32, %arg1: memref<1x7x256xf32, #tpu.memory_space<vmem>>, %arg2: memref<16x7xf32, #tpu.memory_space<vmem>>, %arg3: memref<16x1xf32, #tpu.memory_space<vmem>>, %arg4: memref<16x1xf32, #tpu.memory_space<vmem>>, %arg5: memref<16x1xf32, #tpu.memory_space<vmem>>, %arg6: memref<8x16xf32, #tpu.memory_space<vmem>>, %arg7: memref<8x1xf32, #tpu.memory_space<vmem>>, %arg8: memref<1x8x1xf32, #tpu.memory_space<vmem>>, %arg9: memref<1x8x1xf32, #tpu.memory_space<vmem>>, %arg10: memref<1x8x256xf32, #tpu.memory_space<vmem>>, %arg11: memref<1x8x256xf32, #tpu.memory_space<vmem>>) attributes {dimension_semantics = [#tpu.dimension_semantics<parallel>], iteration_bounds = array<i64: 4>, scalar_prefetch = 0 : i64, scratch_operands = 0 : i64, tpu.core_type = #tpu.core_type<tc>, window_params = [{transform_indices = @transform_0, window_bounds = array<i64: 1, 7, 256>}, {pipeline_mode = #tpu.pipeline_mode<synchronous>, transform_indices = @transform_1, window_bounds = array<i64: 16, 7>}, {pipeline_mode = #tpu.pipeline_mode<synchronous>, transform_indices = @transform_2, window_bounds = array<i64: 16, 1>}, {pipeline_mode = #tpu.pipeline_mode<synchronous>, transform_indices = @transform_3, window_bounds = array<i64: 16, 1>}, {pipeline_mode = #tpu.pipeline_mode<synchronous>, transform_indices = @transform_4, window_bounds = array<i64: 16, 1>}, {pipeline_mode = #tpu.pipeline_mode<synchronous>, transform_indices = @transform_5, window_bounds = array<i64: 8, 16>}, {pipeline_mode = #tpu.pipeline_mode<synchronous>, transform_indices = @transform_6, window_bounds = array<i64: 8, 1>}, {transform_indices = @transform_7, window_bounds = array<i64: 1, 8, 1>}, {transform_indices = @transform_8, window_bounds = array<i64: 1, 8, 1>}, {transform_indices = @transform_9, window_bounds = array<i64: 1, 8, 256>}, {transform_indices = @transform_10, window_bounds = array<i64: 1, 8, 256>}]} {
    %c0 = arith.constant 0 : index
    %c0_0 = arith.constant 0 : index
    %0 = vector.load %arg2[%c0, %c0_0] : memref<16x7xf32, #tpu.memory_space<vmem>>, vector<16x7xf32>
    %1 = arith.truncf %0 : vector<16x7xf32> to vector<16x7xbf16>
    %c0_1 = arith.constant 0 : index
    %c0_2 = arith.constant 0 : index
    %2 = vector.load %arg6[%c0_1, %c0_2] : memref<8x16xf32, #tpu.memory_space<vmem>>, vector<8x16xf32>
    %3 = arith.truncf %2 : vector<8x16xf32> to vector<8x16xbf16>
    %c0_3 = arith.constant 0 : index
    %c0_4 = arith.constant 0 : index
    %c0_5 = arith.constant 0 : index
    %4 = vector.load %arg1[%c0_3, %c0_4, %c0_5] : memref<1x7x256xf32, #tpu.memory_space<vmem>>, vector<1x7x256xf32>
    %5 = vector.shape_cast %4 : vector<1x7x256xf32> to vector<7x256xf32>
    %6 = arith.truncf %5 : vector<7x256xf32> to vector<7x256xbf16>
    %cst = arith.constant dense<0.000000e+00> : vector<16x256xf32>
    %7 = tpu.matmul %1, %6, %cst {dimension_numbers = #tpu.dot_dimension_numbers<[1], [0], [0], [1], [0, 0, 1, 1], [], []>} : vector<16x7xbf16>, vector<7x256xbf16>, vector<16x256xf32> -> vector<16x256xf32>
    %c0_6 = arith.constant 0 : index
    %c0_7 = arith.constant 0 : index
    %8 = vector.load %arg3[%c0_6, %c0_7] : memref<16x1xf32, #tpu.memory_space<vmem>>, vector<16x1xf32>
    %9 = vector.broadcast %8 : vector<16x1xf32> to vector<16x256xf32>
    %10 = arith.addf %7, %9 : vector<16x256xf32>
    %c0_8 = arith.constant 0 : index
    %c0_9 = arith.constant 0 : index
    %11 = vector.load %arg4[%c0_8, %c0_9] : memref<16x1xf32, #tpu.memory_space<vmem>>, vector<16x1xf32>
    %c0_10 = arith.constant 0 : index
    %c0_11 = arith.constant 0 : index
    %12 = vector.load %arg5[%c0_10, %c0_11] : memref<16x1xf32, #tpu.memory_space<vmem>>, vector<16x1xf32>
    %cst_12 = arith.constant dense<0.000000e+00> : vector<16xf32>
    %13 = vector.multi_reduction <add>, %10, %cst_12 [1] : vector<16x256xf32> to vector<16xf32>
    %14 = vector.shape_cast %13 : vector<16xf32> to vector<16x1xf32>
    %cst_13 = arith.constant 2.560000e+02 : f32
    %15 = vector.broadcast %cst_13 : f32 to vector<16x1xf32>
    %16 = arith.divf %14, %15 : vector<16x1xf32>
    %17 = arith.mulf %10, %10 : vector<16x256xf32>
    %cst_14 = arith.constant dense<0.000000e+00> : vector<16xf32>
    %18 = vector.multi_reduction <add>, %17, %cst_14 [1] : vector<16x256xf32> to vector<16xf32>
    %19 = vector.shape_cast %18 : vector<16xf32> to vector<16x1xf32>
    %cst_15 = arith.constant 2.560000e+02 : f32
    %20 = vector.broadcast %cst_15 : f32 to vector<16x1xf32>
    %21 = arith.divf %19, %20 : vector<16x1xf32>
    %22 = arith.mulf %16, %16 : vector<16x1xf32>
    %23 = arith.subf %21, %22 : vector<16x1xf32>
    %cst_16 = arith.constant 0.000000e+00 : f32
    %24 = vector.broadcast %cst_16 : f32 to vector<16x1xf32>
    %25 = arith.maximumf %23, %24 : vector<16x1xf32>
    %26 = vector.broadcast %16 : vector<16x1xf32> to vector<16x256xf32>
    %27 = arith.subf %10, %26 : vector<16x256xf32>
    %cst_17 = arith.constant 9.99999974E-6 : f32
    %28 = vector.broadcast %cst_17 : f32 to vector<16x1xf32>
    %29 = arith.addf %25, %28 : vector<16x1xf32>
    %30 = math.rsqrt %29 : vector<16x1xf32>
    %31 = vector.broadcast %30 : vector<16x1xf32> to vector<16x256xf32>
    %32 = arith.mulf %27, %31 : vector<16x256xf32>
    %33 = vector.broadcast %11 : vector<16x1xf32> to vector<16x256xf32>
    %34 = arith.mulf %32, %33 : vector<16x256xf32>
    %35 = vector.broadcast %12 : vector<16x1xf32> to vector<16x256xf32>
    %36 = arith.addf %34, %35 : vector<16x256xf32>
    %cst_18 = arith.constant 5.000000e-01 : f32
    %37 = vector.broadcast %cst_18 : f32 to vector<16x256xf32>
    %38 = arith.mulf %37, %36 : vector<16x256xf32>
    %cst_19 = arith.constant 4.471500e-02 : f32
    %39 = vector.broadcast %cst_19 : f32 to vector<16x256xf32>
    %40 = arith.mulf %39, %36 : vector<16x256xf32>
    %41 = arith.mulf %40, %36 : vector<16x256xf32>
    %42 = arith.mulf %41, %36 : vector<16x256xf32>
    %43 = arith.addf %36, %42 : vector<16x256xf32>
    %cst_20 = arith.constant 0.797884583 : f32
    %44 = vector.broadcast %cst_20 : f32 to vector<16x256xf32>
    %45 = arith.mulf %44, %43 : vector<16x256xf32>
    %46 = math.tanh %45 : vector<16x256xf32>
    %cst_21 = arith.constant 1.000000e+00 : f32
    %47 = vector.broadcast %cst_21 : f32 to vector<16x256xf32>
    %48 = arith.addf %47, %46 : vector<16x256xf32>
    %49 = arith.mulf %38, %48 : vector<16x256xf32>
    %50 = arith.truncf %49 : vector<16x256xf32> to vector<16x256xbf16>
    %cst_22 = arith.constant dense<0.000000e+00> : vector<8x256xf32>
    %51 = tpu.matmul %3, %50, %cst_22 {dimension_numbers = #tpu.dot_dimension_numbers<[1], [0], [0], [1], [0, 0, 1, 1], [], []>} : vector<8x16xbf16>, vector<16x256xbf16>, vector<8x256xf32> -> vector<8x256xf32>
    %c0_23 = arith.constant 0 : index
    %c0_24 = arith.constant 0 : index
    %52 = vector.load %arg7[%c0_23, %c0_24] : memref<8x1xf32, #tpu.memory_space<vmem>>, vector<8x1xf32>
    %53 = vector.broadcast %52 : vector<8x1xf32> to vector<8x256xf32>
    %54 = arith.addf %51, %53 : vector<8x256xf32>
    %c0_25 = arith.constant 0 : index
    %c0_26 = arith.constant 0 : index
    %c0_27 = arith.constant 0 : index
    %55 = vector.load %arg10[%c0_25, %c0_26, %c0_27] : memref<1x8x256xf32, #tpu.memory_space<vmem>>, vector<1x8x256xf32>
    %56 = vector.shape_cast %55 : vector<1x8x256xf32> to vector<8x256xf32>
    %57 = vector.shape_cast %54 : vector<8x256xf32> to vector<1x8x256xf32>
    tpu.vector_store %arg10[%c0_25, %c0_26, %c0_27], %57 {strides = array<i32>} : memref<1x8x256xf32, #tpu.memory_space<vmem>>, vector<1x8x256xf32>,
    %c0_28 = arith.constant 0 : index
    %c0_29 = arith.constant 0 : index
    %c0_30 = arith.constant 0 : index
    %58 = vector.load %arg8[%c0_28, %c0_29, %c0_30] : memref<1x8x1xf32, #tpu.memory_space<vmem>>, vector<1x8x1xf32>
    %59 = vector.shape_cast %58 : vector<1x8x1xf32> to vector<8x1xf32>
    %c0_31 = arith.constant 0 : index
    %c0_32 = arith.constant 0 : index
    %c0_33 = arith.constant 0 : index
    %60 = vector.load %arg9[%c0_31, %c0_32, %c0_33] : memref<1x8x1xf32, #tpu.memory_space<vmem>>, vector<1x8x1xf32>
    %61 = vector.shape_cast %60 : vector<1x8x1xf32> to vector<8x1xf32>
    %cst_34 = arith.constant dense<0.000000e+00> : vector<8xf32>
    %62 = vector.multi_reduction <add>, %54, %cst_34 [1] : vector<8x256xf32> to vector<8xf32>
    %63 = vector.shape_cast %62 : vector<8xf32> to vector<8x1xf32>
    %cst_35 = arith.constant 2.560000e+02 : f32
    %64 = vector.broadcast %cst_35 : f32 to vector<8x1xf32>
    %65 = arith.divf %63, %64 : vector<8x1xf32>
    %66 = arith.mulf %54, %54 : vector<8x256xf32>
    %cst_36 = arith.constant dense<0.000000e+00> : vector<8xf32>
    %67 = vector.multi_reduction <add>, %66, %cst_36 [1] : vector<8x256xf32> to vector<8xf32>
    %68 = vector.shape_cast %67 : vector<8xf32> to vector<8x1xf32>
    %cst_37 = arith.constant 2.560000e+02 : f32
    %69 = vector.broadcast %cst_37 : f32 to vector<8x1xf32>
    %70 = arith.divf %68, %69 : vector<8x1xf32>
    %71 = arith.mulf %65, %65 : vector<8x1xf32>
    %72 = arith.subf %70, %71 : vector<8x1xf32>
    %cst_38 = arith.constant 0.000000e+00 : f32
    %73 = vector.broadcast %cst_38 : f32 to vector<8x1xf32>
    %74 = arith.maximumf %72, %73 : vector<8x1xf32>
    %75 = vector.broadcast %65 : vector<8x1xf32> to vector<8x256xf32>
    %76 = arith.subf %54, %75 : vector<8x256xf32>
    %cst_39 = arith.constant 9.99999974E-6 : f32
    %77 = vector.broadcast %cst_39 : f32 to vector<8x1xf32>
    %78 = arith.addf %74, %77 : vector<8x1xf32>
    %79 = math.rsqrt %78 : vector<8x1xf32>
    %80 = vector.broadcast %79 : vector<8x1xf32> to vector<8x256xf32>
    %81 = arith.mulf %76, %80 : vector<8x256xf32>
    %82 = vector.broadcast %59 : vector<8x1xf32> to vector<8x256xf32>
    %83 = arith.mulf %81, %82 : vector<8x256xf32>
    %84 = vector.broadcast %61 : vector<8x1xf32> to vector<8x256xf32>
    %85 = arith.addf %83, %84 : vector<8x256xf32>
    %c0_40 = arith.constant 0 : index
    %c0_41 = arith.constant 0 : index
    %c0_42 = arith.constant 0 : index
    %86 = vector.load %arg11[%c0_40, %c0_41, %c0_42] : memref<1x8x256xf32, #tpu.memory_space<vmem>>, vector<1x8x256xf32>
    %87 = vector.shape_cast %86 : vector<1x8x256xf32> to vector<8x256xf32>
    %88 = vector.shape_cast %85 : vector<8x256xf32> to vector<1x8x256xf32>
    tpu.vector_store %arg11[%c0_40, %c0_41, %c0_42], %88 {strides = array<i32>} : memref<1x8x256xf32, #tpu.memory_space<vmem>>, vector<1x8x256xf32>,
    return
  }
  func.func @transform_0(%arg0: i32) -> (i32, i32, i32) {
    %c0_i32 = arith.constant 0 : i32
    %c0_i32_0 = arith.constant 0 : i32
    %c0_i32_1 = arith.constant 0 : i32
    return %arg0, %c0_i32, %c0_i32_0 : i32, i32, i32
  }
  func.func @transform_1(%arg0: i32) -> (i32, i32) {
    %c0_i32 = arith.constant 0 : i32
    %c0_i32_0 = arith.constant 0 : i32
    %c0_i32_1 = arith.constant 0 : i32
    return %c0_i32, %c0_i32_0 : i32, i32
  }
  func.func @transform_2(%arg0: i32) -> (i32, i32) {
    %c0_i32 = arith.constant 0 : i32
    %c0_i32_0 = arith.constant 0 : i32
    %c0_i32_1 = arith.constant 0 : i32
    return %c0_i32, %c0_i32_0 : i32, i32
  }
  func.func @transform_3(%arg0: i32) -> (i32, i32) {
    %c0_i32 = arith.constant 0 : i32
    %c0_i32_0 = arith.constant 0 : i32
    %c0_i32_1 = arith.constant 0 : i32
    return %c0_i32, %c0_i32_0 : i32, i32
  }
  func.func @transform_4(%arg0: i32) -> (i32, i32) {
    %c0_i32 = arith.constant 0 : i32
    %c0_i32_0 = arith.constant 0 : i32
    %c0_i32_1 = arith.constant 0 : i32
    return %c0_i32, %c0_i32_0 : i32, i32
  }
  func.func @transform_5(%arg0: i32) -> (i32, i32) {
    %c0_i32 = arith.constant 0 : i32
    %c0_i32_0 = arith.constant 0 : i32
    %c0_i32_1 = arith.constant 0 : i32
    return %c0_i32, %c0_i32_0 : i32, i32
  }
  func.func @transform_6(%arg0: i32) -> (i32, i32) {
    %c0_i32 = arith.constant 0 : i32
    %c0_i32_0 = arith.constant 0 : i32
    %c0_i32_1 = arith.constant 0 : i32
    return %c0_i32, %c0_i32_0 : i32, i32
  }
  func.func @transform_7(%arg0: i32) -> (i32, i32, i32) {
    %c0_i32 = arith.constant 0 : i32
    %c0_i32_0 = arith.constant 0 : i32
    %c0_i32_1 = arith.constant 0 : i32
    return %arg0, %c0_i32, %c0_i32_0 : i32, i32, i32
  }
  func.func @transform_8(%arg0: i32) -> (i32, i32, i32) {
    %c0_i32 = arith.constant 0 : i32
    %c0_i32_0 = arith.constant 0 : i32
    %c0_i32_1 = arith.constant 0 : i32
    return %arg0, %c0_i32, %c0_i32_0 : i32, i32, i32
  }
  func.func @transform_9(%arg0: i32) -> (i32, i32, i32) {
    %c0_i32 = arith.constant 0 : i32
    %c0_i32_0 = arith.constant 0 : i32
    %c0_i32_1 = arith.constant 0 : i32
    return %arg0, %c0_i32, %c0_i32_0 : i32, i32, i32
  }
  func.func @transform_10(%arg0: i32) -> (i32, i32, i32) {
    %c0_i32 = arith.constant 0 : i32
    %c0_i32_0 = arith.constant 0 : i32
    %c0_i32_1 = arith.constant 0 : i32
    return %arg0, %c0_i32, %c0_i32_0 : i32, i32, i32
  }
}

</mosaic_0001>

<llo_original>
// kernel: tpu_custom_call.1
$region0: #{tpu_custom_call.1}
  #allocation0 [shape = 'u32[]', space=smem, size = 0x4, offset = 0x4, fixed_abs, tag = 'smem constant byte address 0x4 - core index']
  #allocation1 [shape = 'u32[144,128]{1,0:T(1,128)}', space=vmem, size = 0x12000, scoped, tag = 'internal scratch']
  %s0 = inlined_call_operand.vmem [shape: f32[4,7,256], index: 0, kind: input, shape index: {}]
  %s1 = inlined_call_operand.vmem [shape: f32[16,7], index: 1, kind: input, shape index: {}]
  %s2 = inlined_call_operand.vmem [shape: f32[16,1], index: 2, kind: input, shape index: {}]
  %s3 = inlined_call_operand.vmem [shape: f32[16,1], index: 3, kind: input, shape index: {}]
  %s4 = inlined_call_operand.vmem [shape: f32[16,1], index: 4, kind: input, shape index: {}]
  %s5 = inlined_call_operand.vmem [shape: f32[8,16], index: 5, kind: input, shape index: {}]
  %s6 = inlined_call_operand.vmem [shape: f32[8,1], index: 6, kind: input, shape index: {}]
  %s7 = inlined_call_operand.vmem [shape: f32[4,8,1], index: 7, kind: input, shape index: {}]
  %s8 = inlined_call_operand.vmem [shape: f32[4,8,1], index: 8, kind: input, shape index: {}]
  %s9 = inlined_call_operand.hbm [shape: f32[4,8,256], index: 9, kind: output, shape index: {0}]
  %s10 = inlined_call_operand.hbm [shape: f32[4,8,256], index: 10, kind: output, shape index: {1}]
  %11 = xla_tuple %s9, %s10
  %s12 = sld [smem:[#allocation0]]
  $region77: #{tpu_custom_call.1} parent=0
    _
  %s14 = ssub.s32 1, %s12
  %s15 = scalar_select 0, %s14, %s12
  $region1: #{tpu_custom_call.1} parent=0
    #allocation2 [shape = 'u8[16384]{0}', space=vmem, size = 0x4000, scoped, tag = 'output window, operand 0']
    #allocation3 [shape = 's32[2]{0}', space=sflag, size = 0x8, scoped, tag = 'scoped memory for tpu_custom_call.1']
    #allocation4 [shape = 'u8[16384]{0}', space=vmem, size = 0x4000, scoped, tag = 'output window, operand 1']
    #allocation5 [shape = 's32[2]{0}', space=sflag, size = 0x8, scoped, tag = 'scoped memory for tpu_custom_call.1']
    %16 = vsyncpa [#allocation3], 0
    %s17 = scalar_lea.sflag [#allocation3], 1
    %18 = vsyncpa %s17, 0
    %19 = vsyncpa [#allocation5], 0
    %s20 = scalar_lea.sflag [#allocation5], 1
    %21 = vsyncpa %s20, 0
    loop: start=0, step=1, limit=6
    $region2: #{tpu_custom_call.1} parent=1 // loop_pre_header
      _
    $region3: #{tpu_custom_call.1} parent=1 // loop_header
      %s23 = sphi 0, %s27
      %p24 = scmp.ge.s32.totalorder %s23, 6
      %s33 = sphi 0, %s35
      %s36 = sphi 0, %s33
      %s37 = sphi 0, %s36
      %s53 = sphi 0, %s37
      %s57 = sphi 0, %s57
      %s59 = sphi 0, %s57
      %s60 = sphi 0, %s59
      %s74 = sphi 0, %s60
      %s78 = sphi 0, %s78
      %s80 = sphi 0, %s78
      %s81 = sphi 0, %s80
      %s95 = sphi 0, %s81
      %s99 = sphi 0, %s99
      %s101 = sphi 0, %s99
      %s102 = sphi 0, %s101
      %s116 = sphi 0, %s102
      %s120 = sphi 0, %s120
      %s122 = sphi 0, %s120
      %s123 = sphi 0, %s122
      %s137 = sphi 0, %s123
      %s141 = sphi 0, %s141
      %s143 = sphi 0, %s141
      %s144 = sphi 0, %s143
      %s158 = sphi 0, %s144
      %s162 = sphi 0, %s162
      %s164 = sphi 0, %s162
      %s165 = sphi 0, %s164
      %s179 = sphi 0, %s165
      %s185 = sphi 0, %s187
      %s188 = sphi 0, %s185
      %s189 = sphi 0, %s188
      %s205 = sphi 0, %s189
      %s211 = sphi 0, %s213
      %s214 = sphi 0, %s211
      %s215 = sphi 0, %s214
      %s231 = sphi 0, %s215
      %s237 = sphi 0, %s239
      %s240 = sphi 0, %s237
      %s241 = sphi 0, %s240
      %s257 = sphi 0, %s241
      %s263 = sphi 0, %s265
      %s266 = sphi 0, %s263
      %s267 = sphi 0, %s266
      %s283 = sphi 0, %s267
    $region4: #{tpu_custom_call.1} parent=1 // loop_header_branch
      %26 = sbr.rel (%p24) target = $region8
    $region5: #{tpu_custom_call.1} parent=1 // loop_body
      %s28 = ssub.s32 %s23, 1
      %s29 = ssub.s32 %s23, 2
      %s30 = sadd.s32 %s23, 1
      %s31 = ssub.s32 %s23, %s30
      %p32 = scmp.eq.s32.totalorder %s31, 0
      %s34 = sadd.s32 %s33, 1
      %s35 = scalar_select %p32, %s33, %s34
      %p38 = pneg %p32
      %p39 = scmp.eq.s32.totalorder %s23, 3
      %p40 = por %p38, %p39
      %p41 = scmp.ne.s32.totalorder %s33, %s36
      %p42 = scmp.eq.s32.totalorder %s23, 0
      %p43 = por %p41, %p42
      %p44 = scmp.ne.s32.totalorder %s33, %s36
      %p45 = scmp.eq.s32.totalorder %s28, 3
      %p46 = por %p44, %p45
      %p47 = scmp.ne.s32.totalorder %s36, %s37
      %p48 = scmp.eq.s32.totalorder %s28, 0
      %p49 = por %p47, %p48
      %p50 = scmp.ne.s32.totalorder %s36, %s37
      %p51 = scmp.eq.s32.totalorder %s29, 3
      %p52 = por %p50, %p51
      %p54 = scmp.ne.s32.totalorder %s37, %s53
      %p55 = scmp.eq.s32.totalorder %s29, 0
      %p56 = por %p54, %p55
      %s58 = sadd.s32 %s57, 1
      %p61 = scmp.eq.s32.totalorder %s23, 3
      %p62 = scmp.ne.s32.totalorder %s57, %s59
      %p63 = scmp.eq.s32.totalorder %s23, 0
      %p64 = por %p62, %p63
      %p65 = scmp.ne.s32.totalorder %s57, %s59
      %p66 = scmp.eq.s32.totalorder %s28, 3
      %p67 = por %p65, %p66
      %p68 = scmp.ne.s32.totalorder %s59, %s60
      %p69 = scmp.eq.s32.totalorder %s28, 0
      %p70 = por %p68, %p69
      %p71 = scmp.ne.s32.totalorder %s59, %s60
      %p72 = scmp.eq.s32.totalorder %s29, 3
      %p73 = por %p71, %p72
      %p75 = scmp.ne.s32.totalorder %s60, %s74
      %p76 = scmp.eq.s32.totalorder %s29, 0
      %p77 = por %p75, %p76
      %s79 = sadd.s32 %s78, 1
      %p82 = scmp.eq.s32.totalorder %s23, 3
      %p83 = scmp.ne.s32.totalorder %s78, %s80
      %p84 = scmp.eq.s32.totalorder %s23, 0
      %p85 = por %p83, %p84
      %p86 = scmp.ne.s32.totalorder %s78, %s80
      %p87 = scmp.eq.s32.totalorder %s28, 3
      %p88 = por %p86, %p87
      %p89 = scmp.ne.s32.totalorder %s80, %s81
      %p90 = scmp.eq.s32.totalorder %s28, 0
      %p91 = por %p89, %p90
      %p92 = scmp.ne.s32.totalorder %s80, %s81
      %p93 = scmp.eq.s32.totalorder %s29, 3
      %p94 = por %p92, %p93
      %p96 = scmp.ne.s32.totalorder %s81, %s95
      %p97 = scmp.eq.s32.totalorder %s29, 0
      %p98 = por %p96, %p97
      %s100 = sadd.s32 %s99, 1
      %p103 = scmp.eq.s32.totalorder %s23, 3
      %p104 = scmp.ne.s32.totalorder %s99, %s101
      %p105 = scmp.eq.s32.totalorder %s23, 0
      %p106 = por %p104, %p105
      %p107 = scmp.ne.s32.totalorder %s99, %s101
      %p108 = scmp.eq.s32.totalorder %s28, 3
      %p109 = por %p107, %p108
      %p110 = scmp.ne.s32.totalorder %s101, %s102
      %p111 = scmp.eq.s32.totalorder %s28, 0
      %p112 = por %p110, %p111
      %p113 = scmp.ne.s32.totalorder %s101, %s102
      %p114 = scmp.eq.s32.totalorder %s29, 3
      %p115 = por %p113, %p114
      %p117 = scmp.ne.s32.totalorder %s102, %s116
      %p118 = scmp.eq.s32.totalorder %s29, 0
      %p119 = por %p117, %p118
      %s121 = sadd.s32 %s120, 1
      %p124 = scmp.eq.s32.totalorder %s23, 3
      %p125 = scmp.ne.s32.totalorder %s120, %s122
      %p126 = scmp.eq.s32.totalorder %s23, 0
      %p127 = por %p125, %p126
      %p128 = scmp.ne.s32.totalorder %s120, %s122
      %p129 = scmp.eq.s32.totalorder %s28, 3
      %p130 = por %p128, %p129
      %p131 = scmp.ne.s32.totalorder %s122, %s123
      %p132 = scmp.eq.s32.totalorder %s28, 0
      %p133 = por %p131, %p132
      %p134 = scmp.ne.s32.totalorder %s122, %s123
      %p135 = scmp.eq.s32.totalorder %s29, 3
      %p136 = por %p134, %p135
      %p138 = scmp.ne.s32.totalorder %s123, %s137
      %p139 = scmp.eq.s32.totalorder %s29, 0
      %p140 = por %p138, %p139
      %s142 = sadd.s32 %s141, 1
      %p145 = scmp.eq.s32.totalorder %s23, 3
      %p146 = scmp.ne.s32.totalorder %s141, %s143
      %p147 = scmp.eq.s32.totalorder %s23, 0
      %p148 = por %p146, %p147
      %p149 = scmp.ne.s32.totalorder %s141, %s143
      %p150 = scmp.eq.s32.totalorder %s28, 3
      %p151 = por %p149, %p150
      %p152 = scmp.ne.s32.totalorder %s143, %s144
      %p153 = scmp.eq.s32.totalorder %s28, 0
      %p154 = por %p152, %p153
      %p155 = scmp.ne.s32.totalorder %s143, %s144
      %p156 = scmp.eq.s32.totalorder %s29, 3
      %p157 = por %p155, %p156
      %p159 = scmp.ne.s32.totalorder %s144, %s158
      %p160 = scmp.eq.s32.totalorder %s29, 0
      %p161 = por %p159, %p160
      %s163 = sadd.s32 %s162, 1
      %p166 = scmp.eq.s32.totalorder %s23, 3
      %p167 = scmp.ne.s32.totalorder %s162, %s164
      %p168 = scmp.eq.s32.totalorder %s23, 0
      %p169 = por %p167, %p168
      %p170 = scmp.ne.s32.totalorder %s162, %s164
      %p171 = scmp.eq.s32.totalorder %s28, 3
      %p172 = por %p170, %p171
      %p173 = scmp.ne.s32.totalorder %s164, %s165
      %p174 = scmp.eq.s32.totalorder %s28, 0
      %p175 = por %p173, %p174
      %p176 = scmp.ne.s32.totalorder %s164, %s165
      %p177 = scmp.eq.s32.totalorder %s29, 3
      %p178 = por %p176, %p177
      %p180 = scmp.ne.s32.totalorder %s165, %s179
      %p181 = scmp.eq.s32.totalorder %s29, 0
      %p182 = por %p180, %p181
      %s183 = ssub.s32 %s23, %s30
      %p184 = scmp.eq.s32.totalorder %s183, 0
      %s186 = sadd.s32 %s185, 1
      %s187 = scalar_select %p184, %s185, %s186
      %p190 = pneg %p184
      %p191 = scmp.eq.s32.totalorder %s23, 3
      %p192 = por %p190, %p191
      %p193 = scmp.ne.s32.totalorder %s185, %s188
      %p194 = scmp.eq.s32.totalorder %s23, 0
      %p195 = por %p193, %p194
      %p196 = scmp.ne.s32.totalorder %s185, %s188
      %p197 = scmp.eq.s32.totalorder %s28, 3
      %p198 = por %p196, %p197
      %p199 = scmp.ne.s32.totalorder %s188, %s189
      %p200 = scmp.eq.s32.totalorder %s28, 0
      %p201 = por %p199, %p200
      %p202 = scmp.ne.s32.totalorder %s188, %s189
      %p203 = scmp.eq.s32.totalorder %s29, 3
      %p204 = por %p202, %p203
      %p206 = scmp.ne.s32.totalorder %s189, %s205
      %p207 = scmp.eq.s32.totalorder %s29, 0
      %p208 = por %p206, %p207
      %s209 = ssub.s32 %s23, %s30
      %p210 = scmp.eq.s32.totalorder %s209, 0
      %s212 = sadd.s32 %s211, 1
      %s213 = scalar_select %p210, %s211, %s212
      %p216 = pneg %p210
      %p217 = scmp.eq.s32.totalorder %s23, 3
      %p218 = por %p216, %p217
      %p219 = scmp.ne.s32.totalorder %s211, %s214
      %p220 = scmp.eq.s32.totalorder %s23, 0
      %p221 = por %p219, %p220
      %p222 = scmp.ne.s32.totalorder %s211, %s214
      %p223 = scmp.eq.s32.totalorder %s28, 3
      %p224 = por %p222, %p223
      %p225 = scmp.ne.s32.totalorder %s214, %s215
      %p226 = scmp.eq.s32.totalorder %s28, 0
      %p227 = por %p225, %p226
      %p228 = scmp.ne.s32.totalorder %s214, %s215
      %p229 = scmp.eq.s32.totalorder %s29, 3
      %p230 = por %p228, %p229
      %p232 = scmp.ne.s32.totalorder %s215, %s231
      %p233 = scmp.eq.s32.totalorder %s29, 0
      %p234 = por %p232, %p233
      %s235 = ssub.s32 %s23, %s30
      %p236 = scmp.eq.s32.totalorder %s235, 0
      %s238 = sadd.s32 %s237, 1
      %s239 = scalar_select %p236, %s237, %s238
      %p242 = pneg %p236
      %p243 = scmp.eq.s32.totalorder %s23, 3
      %p244 = por %p242, %p243
      %p245 = scmp.ne.s32.totalorder %s237, %s240
      %p246 = scmp.eq.s32.totalorder %s23, 0
      %p247 = por %p245, %p246
      %p248 = scmp.ne.s32.totalorder %s237, %s240
      %p249 = scmp.eq.s32.totalorder %s28, 3
      %p250 = por %p248, %p249
      %p251 = scmp.ne.s32.totalorder %s240, %s241
      %p252 = scmp.eq.s32.totalorder %s28, 0
      %p253 = por %p251, %p252
      %p254 = scmp.ne.s32.totalorder %s240, %s241
      %p255 = scmp.eq.s32.totalorder %s29, 3
      %p256 = por %p254, %p255
      %p258 = scmp.ne.s32.totalorder %s241, %s257
      %p259 = scmp.eq.s32.totalorder %s29, 0
      %p260 = por %p258, %p259
      %s261 = ssub.s32 %s23, %s30
      %p262 = scmp.eq.s32.totalorder %s261, 0
      %s264 = sadd.s32 %s263, 1
      %s265 = scalar_select %p262, %s263, %s264
      %p268 = pneg %p262
      %p269 = scmp.eq.s32.totalorder %s23, 3
      %p270 = por %p268, %p269
      %p271 = scmp.ne.s32.totalorder %s263, %s266
      %p272 = scmp.eq.s32.totalorder %s23, 0
      %p273 = por %p271, %p272
      %p274 = scmp.ne.s32.totalorder %s263, %s266
      %p275 = scmp.eq.s32.totalorder %s28, 3
      %p276 = por %p274, %p275
      %p277 = scmp.ne.s32.totalorder %s266, %s267
      %p278 = scmp.eq.s32.totalorder %s28, 0
      %p279 = por %p277, %p278
      %p280 = scmp.ne.s32.totalorder %s266, %s267
      %p281 = scmp.eq.s32.totalorder %s29, 3
      %p282 = por %p280, %p281
      %p284 = scmp.ne.s32.totalorder %s267, %s283
      %p285 = scmp.eq.s32.totalorder %s29, 0
      %p286 = por %p284, %p285
      %p287 = scmp.le.s32.totalorder 1, %s23
      %p288 = scmp.lt.s32.totalorder %s23, 5
      %p289 = pnand %p287, %p288
      %p290 = pneg %p289
      // Predicated region
      $region9: #{tpu_custom_call.1} parent=5 // pred_check
        _
      $region10: #{tpu_custom_call.1} parent=5 // pred_check_branch
        %292 = sbr.rel (%p289) target = $region12
      $region11: #{tpu_custom_call.1} parent=5 // pred_region
        %s293 = ssub.s32 %s23, 1
        // Predicated region
        $region13: #{tpu_custom_call.1} parent=11 // pred_check
          %p294 = pneg %p70
        $region14: #{tpu_custom_call.1} parent=11 // pred_check_branch
          %296 = sbr.rel (%p294) target = $region16
        $region15: #{tpu_custom_call.1} parent=11 // pred_region
          _
        $region16: #{tpu_custom_call.1} parent=11 // pred_fallthru
          _
        // Predicated region
        $region17: #{tpu_custom_call.1} parent=11 // pred_check
          %p297 = pneg %p91
        $region18: #{tpu_custom_call.1} parent=11 // pred_check_branch
          %299 = sbr.rel (%p297) target = $region20
        $region19: #{tpu_custom_call.1} parent=11 // pred_region
          _
        $region20: #{tpu_custom_call.1} parent=11 // pred_fallthru
          _
        // Predicated region
        $region21: #{tpu_custom_call.1} parent=11 // pred_check
          %p300 = pneg %p112
        $region22: #{tpu_custom_call.1} parent=11 // pred_check_branch
          %302 = sbr.rel (%p300) target = $region24
        $region23: #{tpu_custom_call.1} parent=11 // pred_region
          _
        $region24: #{tpu_custom_call.1} parent=11 // pred_fallthru
          _
        // Predicated region
        $region25: #{tpu_custom_call.1} parent=11 // pred_check
          %p303 = pneg %p133
        $region26: #{tpu_custom_call.1} parent=11 // pred_check_branch
          %305 = sbr.rel (%p303) target = $region28
        $region27: #{tpu_custom_call.1} parent=11 // pred_region
          _
        $region28: #{tpu_custom_call.1} parent=11 // pred_fallthru
          _
        // Predicated region
        $region29: #{tpu_custom_call.1} parent=11 // pred_check
          %p306 = pneg %p154
        $region30: #{tpu_custom_call.1} parent=11 // pred_check_branch
          %308 = sbr.rel (%p306) target = $region32
        $region31: #{tpu_custom_call.1} parent=11 // pred_region
          _
        $region32: #{tpu_custom_call.1} parent=11 // pred_fallthru
          _
        // Predicated region
        $region33: #{tpu_custom_call.1} parent=11 // pred_check
          %p309 = pneg %p175
        $region34: #{tpu_custom_call.1} parent=11 // pred_check_branch
          %311 = sbr.rel (%p309) target = $region36
        $region35: #{tpu_custom_call.1} parent=11 // pred_region
          _
        $region36: #{tpu_custom_call.1} parent=11 // pred_fallthru
          _
      $region12: #{tpu_custom_call.1} parent=5 // pred_fallthru
        _
      %p312 = scmp.lt.s32.totalorder %s23, 4
      // Predicated region
      $region37: #{tpu_custom_call.1} parent=5 // pred_check
        %p313 = pneg %p312
      $region38: #{tpu_custom_call.1} parent=5 // pred_check_branch
        %315 = sbr.rel (%p313) target = $region40
      $region39: #{tpu_custom_call.1} parent=5 // pred_region
        // Predicated region
        $region41: #{tpu_custom_call.1} parent=39 // pred_check
          %p316 = pneg %p43
        $region42: #{tpu_custom_call.1} parent=39 // pred_check_branch
          %318 = sbr.rel (%p316) target = $region44
        $region43: #{tpu_custom_call.1} parent=39 // pred_region
          %p319 = scmp.lt.s32.totalorder %s23, 3
          %s320 = scalar_select %p319, %s23, 3
          %s321 = smul.addr %s320, 2
          %s322 = smul.addr %s321, 8
          %s323 = scalar_lea.vmem %s0, %s322
        $region44: #{tpu_custom_call.1} parent=39 // pred_fallthru
          _
        // Predicated region
        $region45: #{tpu_custom_call.1} parent=39 // pred_check
          %p324 = pneg %p195
        $region46: #{tpu_custom_call.1} parent=39 // pred_check_branch
          %326 = sbr.rel (%p324) target = $region48
        $region47: #{tpu_custom_call.1} parent=39 // pred_region
          %p327 = scmp.lt.s32.totalorder %s23, 3
          %s328 = scalar_select %p327, %s23, 3
          %s329 = smul.addr %s328, 8
          %s330 = scalar_lea.vmem %s7, %s329
        $region48: #{tpu_custom_call.1} parent=39 // pred_fallthru
          _
        // Predicated region
        $region49: #{tpu_custom_call.1} parent=39 // pred_check
          %p331 = pneg %p221
        $region50: #{tpu_custom_call.1} parent=39 // pred_check_branch
          %333 = sbr.rel (%p331) target = $region52
        $region51: #{tpu_custom_call.1} parent=39 // pred_region
          %p334 = scmp.lt.s32.totalorder %s23, 3
          %s335 = scalar_select %p334, %s23, 3
          %s336 = smul.addr %s335, 8
          %s337 = scalar_lea.vmem %s8, %s336
        $region52: #{tpu_custom_call.1} parent=39 // pred_fallthru
          _
      $region40: #{tpu_custom_call.1} parent=5 // pred_fallthru
        _
      %p338 = scmp.le.s32.totalorder 1, %s23
      %p339 = scmp.lt.s32.totalorder %s23, 5
      %p340 = pnand %p338, %p339
      %p341 = pneg %p340
      // Predicated region
      $region53: #{tpu_custom_call.1} parent=5 // pred_check
        _
      $region54: #{tpu_custom_call.1} parent=5 // pred_check_branch
        %343 = sbr.rel (%p340) target = $region56
      $region55: #{tpu_custom_call.1} parent=5 // pred_region
        %s344 = ssub.s32 %s23, 1
        %p345 = scmp.lt.s32.totalorder %s28, 3
        %s346 = scalar_select %p345, %s28, 3
        %s347 = smul.addr %s346, 2
        %s348 = smul.addr %s347, 8
        %s349 = scalar_lea.vmem %s0, %s348
        %p350 = pneg %p49
        %p351 = pneg %p46
        %p352 = pneg %p70
        %p353 = pneg %p67
        %p354 = pneg %p91
        %p355 = pneg %p88
        %p356 = pneg %p112
        %p357 = pneg %p109
        %p358 = pneg %p133
        %p359 = pneg %p130
        %p360 = pneg %p154
        %p361 = pneg %p151
        %p362 = pneg %p175
        %p363 = pneg %p172
        %p364 = scmp.lt.s32.totalorder %s28, 3
        %s365 = scalar_select %p364, %s28, 3
        %s366 = smul.addr %s365, 8
        %s367 = scalar_lea.vmem %s7, %s366
        %p368 = pneg %p201
        %p369 = pneg %p198
        %p370 = scmp.lt.s32.totalorder %s28, 3
        %s371 = scalar_select %p370, %s28, 3
        %s372 = smul.addr %s371, 8
        %s373 = scalar_lea.vmem %s8, %s372
        %p374 = pneg %p227
        %p375 = pneg %p224
        %p376 = pneg %p253
        %p377 = pneg %p250
        %s378 = sand.u32 %s240, 1
        %s379 = scalar_lea.sflag [#allocation3], %s378
        %s380 = sand.u32 %s240, 1
        %s381 = smul.addr %s380, 16
        %s382 = scalar_lea.vmem [#allocation2], %s381
        %p383 = pneg %p279
        %p384 = pneg %p276
        %s385 = sand.u32 %s266, 1
        %s386 = scalar_lea.sflag [#allocation5], %s385
        %s387 = sand.u32 %s266, 1
        %s388 = smul.addr %s387, 16
        %s389 = scalar_lea.vmem [#allocation4], %s388
        %p390 = scmp.lt.s32.totalorder %s28, 3
        %s391 = scalar_select %p390, %s28, 3
        %s392 = smul.addr %s391, 2
        %s393 = smul.addr %s392, 8
        %s394 = scalar_lea.vmem %s0, %s393
        %p395 = scmp.lt.s32.totalorder %s28, 3
        %s396 = scalar_select %p395, %s28, 3
        %s397 = smul.addr %s396, 8
        %s398 = scalar_lea.vmem %s7, %s397
        %p399 = scmp.lt.s32.totalorder %s28, 3
        %s400 = scalar_select %p399, %s28, 3
        %s401 = smul.addr %s400, 8
        %s402 = scalar_lea.vmem %s8, %s401
        %v404 = vld [vmem:[%s1] sm:$0xff]
        %v405 = vld [vmem:[%s1 + $0x8] sm:$0xff]
        %v406 = vpack.c.bf16 %v405, %v404
        %v407 = vld [vmem:[%s5] sm:$0xff]
        %v408 = vpack.c.bf16 %v407, %v407
        %v409 = vld [vmem:[%s394] sm:$0x7f]
        %v410 = vld [vmem:[%s394 + $0x8] sm:$0x7f]
        %v411 = vpack.c.bf16 %v409, %v409
        %v412 = vpack.c.bf16 %v410, %v410
        %v413 = vld [vmem:[%s2] sm:$0xff]
        %v414 = vld [vmem:[%s2 + $0x8] sm:$0xff]
        %416 = vset.pattern.permute.xlu0 0
        %417 = vperm.xlu0 %416, %v413
        %v418 = vpop.permute.xlu0 %417
        %421 = vset.pattern.permute.xlu0 0
        %422 = vperm.xlu0 %421, %v414
        %v423 = vpop.permute.xlu0 %422
        %vm425 = vcmask 56320
        %v427 = vsel %vm425, %v406, 0
        %vm429 = vcmask 1042432
        %vm430 = vcmask 1043456
        %v431 = vsel %vm429, 4294967295, 65535
        %v432 = vsel %vm430, %v431, 0
        %v434 = vand.u32 %v411, %v432
        %v437 = vand.u32 %v412, %v432
        %439 = vmatprep.subr.bf16.mxu0 %v437
        %440 = vmatpush1.bf16.msra.mxu0 %v434
        %441 = vmatprep.subr.bf16.mxu0 0
        %442 = vmatpush1.bf16.msra.mxu0 0
        %443 = vmatprep.subr.bf16.mxu0 0
        %444 = vmatpush1.bf16.msra.mxu0 0
        %445 = vmatprep.subr.bf16.mxu0 0
        %446 = vmatpush1.bf16.msra.mxu0 0
        %447 = vmatprep.subr.bf16.mxu0 0
        %448 = vmatpush1.bf16.msra.mxu0 0
        %449 = vmatprep.subr.bf16.mxu0 0
        %450 = vmatpush1.bf16.msra.mxu0 0
        %451 = vmatprep.subr.bf16.mxu0 0
        %452 = vmatpush1.bf16.msra.mxu0 0
        %453 = vmatprep.subr.bf16.mxu0 0
        %454 = vmatpush1.bf16.msra.mxu0 0
        %455 = vmatprep.subr.bf16.mxu0 0
        %456 = vmatpush1.bf16.msra.mxu0 0
        %457 = vmatprep.subr.bf16.mxu0 0
        %458 = vmatpush1.bf16.msra.mxu0 0
        %459 = vmatprep.subr.bf16.mxu0 0
        %460 = vmatpush1.bf16.msra.mxu0 0
        %461 = vmatprep.subr.bf16.mxu0 0
        %462 = vmatpush1.bf16.msra.mxu0 0
        %463 = vmatprep.subr.bf16.mxu0 0
        %464 = vmatpush1.bf16.msra.mxu0 0
        %465 = vmatprep.subr.bf16.mxu0 0
        %466 = vmatpush1.bf16.msra.mxu0 0
        %467 = vmatprep.subr.bf16.mxu0 0
        %468 = vmatpush1.bf16.msra.mxu0 0
        %469 = vmatprep.subr.bf16.mxu0 0
        %470 = vmatpush1.bf16.msra.mxu0 0
        %471 = vmatprep.mubr.bf16.mxu0 0
        %472 = vmatmul.mubr.bf16.gmra.mrb[0].mxu0 %v427
        %v473 = vpop.f32.mrb[0].mxu0
        %v474 = vadd.f32 %v418, %v473
        %v475 = vpop.f32.mrb[0].mxu0
        %v476 = vadd.f32 %v418, %v475
        %v477 = vpop.f32.mrb[0].mxu0
        %v478 = vadd.f32 %v423, %v477
        %v479 = vpop.f32.mrb[0].mxu0
        %v480 = vadd.f32 %v423, %v479
        %481 = vdwg.mxu0
        %v482 = vld [vmem:[%s3] sm:$0xff]
        %v483 = vld [vmem:[%s3 + $0x8] sm:$0xff]
        %v484 = vld [vmem:[%s4] sm:$0xff]
        %v485 = vld [vmem:[%s4 + $0x8] sm:$0xff]
        %v486 = vadd.f32 %v474, %v476
        %487 = vadd.xlane.f32.xlu0 %v486
        %v488 = vpop.xlane.xlu0 %487
        %v489 = vadd.f32 %v478, %v480
        %490 = vadd.xlane.f32.xlu0 %v489
        %v491 = vpop.xlane.xlu0 %490
        %v492 = vrcp.pop 256.0
        %v493 = vmul.f32 %v488, %v492
        %v494 = vmul.f32 %v491, %v492
        %v495 = vmul.f32 %v474, %v474
        %v496 = vmul.f32 %v476, %v476
        %v497 = vmul.f32 %v478, %v478
        %v498 = vmul.f32 %v480, %v480
        %v499 = vadd.f32 %v495, %v496
        %500 = vadd.xlane.f32.xlu0 %v499
        %v501 = vpop.xlane.xlu0 %500
        %v502 = vadd.f32 %v497, %v498
        %503 = vadd.xlane.f32.xlu0 %v502
        %v504 = vpop.xlane.xlu0 %503
        %v505 = vmul.f32 %v501, %v492
        %v506 = vmul.f32 %v504, %v492
        %v507 = vmul.f32 %v493, %v493
        %v508 = vmul.f32 %v494, %v494
        %v509 = vsub.f32 %v505, %v507
        %v510 = vsub.f32 %v506, %v508
        %v511 = vmax.f32 %v509, 0.0
        %v512 = vmax.f32 %v510, 0.0
        %v513 = vsub.f32 %v474, %v493
        %v514 = vsub.f32 %v476, %v493
        %v515 = vsub.f32 %v478, %v494
        %v516 = vsub.f32 %v480, %v494
        %v517 = vadd.f32 %v511, 1e-05
        %v518 = vadd.f32 %v512, 1e-05
        %v519 = vrsqrt.pop %v517
        %v520 = vrsqrt.pop %v518
        %v521 = vmul.f32 %v513, %v519
        %v522 = vmul.f32 %v514, %v519
        %v523 = vmul.f32 %v515, %v520
        %v524 = vmul.f32 %v516, %v520
        %526 = vset.pattern.permute.xlu0 0
        %527 = vperm.xlu0 %526, %v482
        %v528 = vpop.permute.xlu0 %527
        %531 = vset.pattern.permute.xlu0 0
        %532 = vperm.xlu0 %531, %v483
        %v533 = vpop.permute.xlu0 %532
        %v535 = vmul.f32 %v521, %v528
        %v536 = vmul.f32 %v522, %v528
        %v537 = vmul.f32 %v523, %v533
        %v538 = vmul.f32 %v524, %v533
        %540 = vset.pattern.permute.xlu0 0
        %541 = vperm.xlu0 %540, %v484
        %v542 = vpop.permute.xlu0 %541
        %545 = vset.pattern.permute.xlu0 0
        %546 = vperm.xlu0 %545, %v485
        %v547 = vpop.permute.xlu0 %546
        %v549 = vadd.f32 %v535, %v542
        %v550 = vadd.f32 %v536, %v542
        %v551 = vadd.f32 %v537, %v547
        %v552 = vadd.f32 %v538, %v547
        %v553 = vmul.f32 %v549, 0.5
        %v554 = vmul.f32 %v550, 0.5
        %v555 = vmul.f32 %v551, 0.5
        %v556 = vmul.f32 %v552, 0.5
        %v557 = vmul.f32 %v549, 0.044715
        %v558 = vmul.f32 %v550, 0.044715
        %v559 = vmul.f32 %v551, 0.044715
        %v560 = vmul.f32 %v552, 0.044715
        %v561 = vmul.f32 %v557, %v549
        %v562 = vmul.f32 %v558, %v550
        %v563 = vmul.f32 %v559, %v551
        %v564 = vmul.f32 %v560, %v552
        %v565 = vmul.f32 %v561, %v549
        %v566 = vmul.f32 %v562, %v550
        %v567 = vmul.f32 %v563, %v551
        %v568 = vmul.f32 %v564, %v552
        %v569 = vadd.f32 %v549, %v565
        %v570 = vadd.f32 %v550, %v566
        %v571 = vadd.f32 %v551, %v567
        %v572 = vadd.f32 %v552, %v568
        %v573 = vmul.f32 %v569, 0.7978846
        %v574 = vmul.f32 %v570, 0.7978846
        %v575 = vmul.f32 %v571, 0.7978846
        %v576 = vmul.f32 %v572, 0.7978846
        %v577 = vtanh.pop %v573
        %v578 = vtanh.pop %v574
        %v579 = vtanh.pop %v575
        %v580 = vtanh.pop %v576
        %v581 = vadd.f32 %v577, 1.0
        %v582 = vadd.f32 %v578, 1.0
        %v583 = vadd.f32 %v579, 1.0
        %v584 = vadd.f32 %v580, 1.0
        %v585 = vmul.f32 %v553, %v581
        %v586 = vmul.f32 %v554, %v582
        %v587 = vmul.f32 %v555, %v583
        %v588 = vmul.f32 %v556, %v584
        %v589 = vpack.c.bf16 %v587, %v585
        %v590 = vpack.c.bf16 %v588, %v586
        %v591 = vld [vmem:[%s6] sm:$0xff]
        %593 = vset.pattern.permute.xlu0 0
        %594 = vperm.xlu0 %593, %v591
        %v595 = vpop.permute.xlu0 %594
        %vm597 = vcmask 130048
        %v599 = vsel %vm597, %v408, 0
        %601 = vmatprep.subr.bf16.mxu0 %v590
        %602 = vmatpush1.bf16.msra.mxu0 %v589
        %603 = vmatprep.subr.bf16.mxu0 0
        %604 = vmatpush1.bf16.msra.mxu0 0
        %605 = vmatprep.subr.bf16.mxu0 0
        %606 = vmatpush1.bf16.msra.mxu0 0
        %607 = vmatprep.subr.bf16.mxu0 0
        %608 = vmatpush1.bf16.msra.mxu0 0
        %609 = vmatprep.subr.bf16.mxu0 0
        %610 = vmatpush1.bf16.msra.mxu0 0
        %611 = vmatprep.subr.bf16.mxu0 0
        %612 = vmatpush1.bf16.msra.mxu0 0
        %613 = vmatprep.subr.bf16.mxu0 0
        %614 = vmatpush1.bf16.msra.mxu0 0
        %615 = vmatprep.subr.bf16.mxu0 0
        %616 = vmatpush1.bf16.msra.mxu0 0
        %617 = vmatprep.subr.bf16.mxu0 0
        %618 = vmatpush1.bf16.msra.mxu0 0
        %619 = vmatprep.subr.bf16.mxu0 0
        %620 = vmatpush1.bf16.msra.mxu0 0
        %621 = vmatprep.subr.bf16.mxu0 0
        %622 = vmatpush1.bf16.msra.mxu0 0
        %623 = vmatprep.subr.bf16.mxu0 0
        %624 = vmatpush1.bf16.msra.mxu0 0
        %625 = vmatprep.subr.bf16.mxu0 0
        %626 = vmatpush1.bf16.msra.mxu0 0
        %627 = vmatprep.subr.bf16.mxu0 0
        %628 = vmatpush1.bf16.msra.mxu0 0
        %629 = vmatprep.subr.bf16.mxu0 0
        %630 = vmatpush1.bf16.msra.mxu0 0
        %631 = vmatprep.subr.bf16.mxu0 0
        %632 = vmatpush1.bf16.msra.mxu0 0
        %633 = vmatprep.mubr.bf16.mxu0 0
        %634 = vmatmul.mubr.bf16.gmra.mrb[0].mxu0 %v599
        %v635 = vpop.f32.mrb[0].mxu0
        %v636 = vadd.f32 %v595, %v635
        %v637 = vpop.f32.mrb[0].mxu0
        %v638 = vadd.f32 %v595, %v637
        %v639 = vpop.f32.mrb[0].mxu0
        %v640 = vpop.f32.mrb[0].mxu0
        %641 = vdwg.mxu0
        %642 = vst [vmem:[%s382] sm:$0xff] %v636
        %643 = vst [vmem:[%s382 + $0x8] sm:$0xff] %v638
        %v644 = vld [vmem:[%s398] sm:$0xff]
        %v645 = vld [vmem:[%s402] sm:$0xff]
        %v646 = vadd.f32 %v636, %v638
        %647 = vadd.xlane.f32.xlu0 %v646
        %v648 = vpop.xlane.xlu0 %647
        %v649 = vmul.f32 %v648, %v492
        %v650 = vmul.f32 %v636, %v636
        %v651 = vmul.f32 %v638, %v638
        %v652 = vadd.f32 %v650, %v651
        %653 = vadd.xlane.f32.xlu0 %v652
        %v654 = vpop.xlane.xlu0 %653
        %v655 = vmul.f32 %v654, %v492
        %v656 = vmul.f32 %v649, %v649
        %v657 = vsub.f32 %v655, %v656
        %v658 = vmax.f32 %v657, 0.0
        %v659 = vsub.f32 %v636, %v649
        %v660 = vsub.f32 %v638, %v649
        %v661 = vadd.f32 %v658, 1e-05
        %v662 = vrsqrt.pop %v661
        %v663 = vmul.f32 %v659, %v662
        %v664 = vmul.f32 %v660, %v662
        %666 = vset.pattern.permute.xlu0 0
        %667 = vperm.xlu0 %666, %v644
        %v668 = vpop.permute.xlu0 %667
        %v670 = vmul.f32 %v663, %v668
        %v671 = vmul.f32 %v664, %v668
        %673 = vset.pattern.permute.xlu0 0
        %674 = vperm.xlu0 %673, %v645
        %v675 = vpop.permute.xlu0 %674
        %v677 = vadd.f32 %v670, %v675
        %v678 = vadd.f32 %v671, %v675
        %679 = vst [vmem:[%s389] sm:$0xff] %v677
        %680 = vst [vmem:[%s389 + $0x8] sm:$0xff] %v678
        %s681 = sand.u32 %s240, 1
        %s682 = scalar_lea.sflag [#allocation3], %s681
        %s683 = sand.u32 %s240, 1
        %s684 = smul.addr %s683, 16
        %s685 = scalar_lea.vmem [#allocation2], %s684
        %s686 = sand.u32 %s266, 1
        %s687 = scalar_lea.sflag [#allocation5], %s686
        %s688 = sand.u32 %s266, 1
        %s689 = smul.addr %s688, 16
        %s690 = scalar_lea.vmem [#allocation4], %s689
        // Predicated region
        $region57: #{tpu_custom_call.1} parent=55 // pred_check
          %p691 = pneg %p250
        $region58: #{tpu_custom_call.1} parent=55 // pred_check_branch
          %693 = sbr.rel (%p691) target = $region60
        $region59: #{tpu_custom_call.1} parent=55 // pred_region
          %s695 = ssub.s32 256, 256
          %696 = vsyncadd %s682, %s695
          %s697 = smul.addr %s28, 2
          %s698 = smul.addr %s697, 128
          %s699 = scalar_lea.hbm %s9, %s698
          %s701 = sshll.u32 %s685, 4
          %s702 = int_to_ptr.vmem [resolvable:$true] %s701
          %704 = dma.vmem_to_hbm [thread:$0]  %s702, 256, %s699, %s682
        $region60: #{tpu_custom_call.1} parent=55 // pred_fallthru
          _
        // Predicated region
        $region61: #{tpu_custom_call.1} parent=55 // pred_check
          %p705 = pneg %p276
        $region62: #{tpu_custom_call.1} parent=55 // pred_check_branch
          %707 = sbr.rel (%p705) target = $region64
        $region63: #{tpu_custom_call.1} parent=55 // pred_region
          %s709 = ssub.s32 256, 256
          %710 = vsyncadd %s687, %s709
          %s711 = smul.addr %s28, 2
          %s712 = smul.addr %s711, 128
          %s713 = scalar_lea.hbm %s10, %s712
          %s715 = sshll.u32 %s690, 4
          %s716 = int_to_ptr.vmem [resolvable:$true] %s715
          %718 = dma.vmem_to_hbm [thread:$0]  %s716, 256, %s713, %s687
        $region64: #{tpu_custom_call.1} parent=55 // pred_fallthru
          _
      $region56: #{tpu_custom_call.1} parent=5 // pred_fallthru
        _
      %p719 = scmp.le.s32.totalorder 2, %s23
      // Predicated region
      $region65: #{tpu_custom_call.1} parent=5 // pred_check
        %p720 = pneg %p719
      $region66: #{tpu_custom_call.1} parent=5 // pred_check_branch
        %722 = sbr.rel (%p720) target = $region68
      $region67: #{tpu_custom_call.1} parent=5 // pred_region
        %s723 = ssub.s32 %s23, 2
        // Predicated region
        $region69: #{tpu_custom_call.1} parent=67 // pred_check
          %p724 = pneg %p256
        $region70: #{tpu_custom_call.1} parent=67 // pred_check_branch
          %726 = sbr.rel (%p724) target = $region72
        $region71: #{tpu_custom_call.1} parent=67 // pred_region
          %s727 = sand.u32 %s241, 1
          %s728 = scalar_lea.sflag [#allocation3], %s727
          %s729 = sand.u32 %s241, 1
          %s730 = smul.addr %s729, 16
          %s731 = scalar_lea.vmem [#allocation2], %s730
          %732 = dma.done %s728, 256
        $region72: #{tpu_custom_call.1} parent=67 // pred_fallthru
          _
        // Predicated region
        $region73: #{tpu_custom_call.1} parent=67 // pred_check
          %p733 = pneg %p282
        $region74: #{tpu_custom_call.1} parent=67 // pred_check_branch
          %735 = sbr.rel (%p733) target = $region76
        $region75: #{tpu_custom_call.1} parent=67 // pred_region
          %s736 = sand.u32 %s267, 1
          %s737 = scalar_lea.sflag [#allocation5], %s736
          %s738 = sand.u32 %s267, 1
          %s739 = smul.addr %s738, 16
          %s740 = scalar_lea.vmem [#allocation4], %s739
          %741 = dma.done %s737, 256
        $region76: #{tpu_custom_call.1} parent=67 // pred_fallthru
          _
      $region68: #{tpu_custom_call.1} parent=5 // pred_fallthru
        _
    $region6: #{tpu_custom_call.1} parent=1 // loop_footer
      %s27 = sadd.s32 1, %s23
    $region7: #{tpu_custom_call.1} parent=1 // loop_footer_branch
      %22 = sbr.rel target = $region3
    $region8: #{tpu_custom_call.1} parent=1 // loop_exit
      _
    %742 = vsyncpa [#allocation3], 1
    %s743 = scalar_lea.sflag [#allocation3], 1
    %744 = vsyncpa %s743, 1
    %745 = vsyncpa [#allocation5], 1
    %s746 = scalar_lea.sflag [#allocation5], 1
    %747 = vsyncpa %s746, 1

</llo_original>
